<compile_context>
chip_gen: v7x
topology: tpu7x:2x2x1
jax: 0.10.0
libtpu: 0.0.40
codegen_flags: <defaults>
</compile_context>

<pallas_src>
import jax
import jax.numpy as jnp
from jax.experimental import pallas as pl
from jax.experimental.pallas import tpu as pltpu


def _round_up(x, m):
    return ((x + m - 1) // m) * m


def _gather_block_kernel(idx_ref, table_ref, out_ref):
    # idx_ref:   (B, 1)         int32 block of clamped row indices.
    # table_ref: (S_pad, D_pad) full embedding table, VMEM-resident every step.
    # out_ref:   (B, D_pad)     lane-dense output block.
    idx = idx_ref[...]                                            # (B, 1)
    s_pad = table_ref.shape[0]
    rows = jax.lax.broadcasted_iota(jnp.int32, (idx.shape[0], s_pad), 1)
    onehot = (rows == idx).astype(table_ref.dtype)                # (B, S_pad)
    out_ref[...] = jnp.dot(
        onehot, table_ref[...], preferred_element_type=jnp.float32
    ).astype(out_ref.dtype)


# VMEM budgets (bytes). 48 MiB is below v7x's 64 MiB physical VMEM and well
# below v5e/v6e's 128 MiB, while above the 16/32 MiB scoped defaults.
_VMEM_LIMIT = 48 * 1024 * 1024
_TABLE_RESIDENT_LIMIT = 12 * 1024 * 1024   # padded table bytes for fast path
_ONEHOT_BUDGET = 4 * 1024 * 1024           # per-step (B, S_pad) f32 intermediate
_OUT_BLOCK_BUDGET = 4 * 1024 * 1024        # per-buffer (B, D_pad) output block


def speaker_table_forward(indices, weight, *, block_rows=512):
    """Embedding lookup: returns weight[indices] with shape indices.shape + (dim,)."""
    orig_shape = indices.shape
    num_speakers, dim = weight.shape
    flat_idx = indices.reshape(-1).astype(jnp.int32)
    n = flat_idx.shape[0]

    # Edge case: empty index tensor.
    if n == 0:
        return jnp.zeros(orig_shape + (dim,), dtype=weight.dtype)

    # Bounds safety: clamp so a bad speaker id can never read off the table.
    flat_idx = jnp.clip(flat_idx, 0, num_speakers - 1)

    d_pad = _round_up(dim, 128)       # lane-dense output / table columns
    s_pad = _round_up(num_speakers, 8)
    itemsize = weight.dtype.itemsize
    table_bytes = s_pad * d_pad * itemsize

    # Fallbacks: non-float tables (MXU one-hot path needs float) or tables that
    # don't comfortably fit VMEM-resident use XLA's native gather.
    # TODO(synk): large-table path should use manual double-buffered row DMAs
    # (memory_space=pl.ANY + pltpu.make_async_copy) instead of jnp.take.
    if (not jnp.issubdtype(weight.dtype, jnp.floating)
            or table_bytes > _TABLE_RESIDENT_LIMIT):
        return jnp.take(weight, flat_idx, axis=0).reshape(orig_shape + (dim,))

    # Block B indices per grid step; B is a multiple of 8, bounded so the
    # one-hot intermediate and the output block stay within their VMEM budgets.
    b = min(block_rows, _round_up(n, 8))
    b = min(b, _ONEHOT_BUDGET // (s_pad * 4))
    b = min(b, _OUT_BLOCK_BUDGET // (d_pad * itemsize))
    b = max(8, (b // 8) * 8)
    n_pad = _round_up(n, b)
    grid = (pl.cdiv(n_pad, b),)

    # Conservative VMEM estimate: double-buffered table + one-hot intermediate
    # + double-buffered output blocks + index blocks + 1 MiB slack.
    est = (2 * table_bytes + b * s_pad * 4 + 2 * b * d_pad * itemsize
           + 2 * b * 128 * 4 + (1 << 20))
    if est > _VMEM_LIMIT:
        return jnp.take(weight, flat_idx, axis=0).reshape(orig_shape + (dim,))

    # Pad indices (with valid index 0 — padded rows are sliced away).
    if n_pad == n:
        idx2 = flat_idx.reshape(n_pad, 1)
    else:
        idx2 = jnp.zeros((n_pad, 1), jnp.int32).at[:n, 0].set(flat_idx)

    # Pad the table only if it is not already (8, 128)-aligned (avoids an
    # extra full-table HBM copy in the common aligned case).
    if s_pad == num_speakers and d_pad == dim:
        table = weight
    else:
        table = (jnp.zeros((s_pad, d_pad), weight.dtype)
                 .at[:num_speakers, :dim].set(weight))

    out = pl.pallas_call(
        _gather_block_kernel,
        out_shape=jax.ShapeDtypeStruct((n_pad, d_pad), weight.dtype),
        grid=grid,
        in_specs=[
            # (B, 1) index block for this step; last dim 1 == full array dim.
            pl.BlockSpec((b, 1), lambda i: (i, 0)),
            # Whole table, constant index_map -> stays resident in VMEM.
            pl.BlockSpec((s_pad, d_pad), lambda i: (0, 0)),
        ],
        out_specs=pl.BlockSpec((b, d_pad), lambda i: (i, 0)),
        compiler_params=pltpu.CompilerParams(
            dimension_semantics=("parallel",),
            vmem_limit_bytes=_VMEM_LIMIT,
        ),
    )(idx2, table)

    return out[:n, :dim].reshape(orig_shape + (dim,))


class SpeakerTablePallas:
    """Mirrors SpeakerTable: a speaker-name->id dict plus an embedding table."""

    def __init__(self, speakers, dim, key):
        # TODO(synk): original module reads speakers.json from disk; the dict is
        # constructed in-script instead (no file I/O allowed here).
        self.speakers = speakers  # dict: name -> id
        num_speakers = len(speakers)
        # Deterministic init (nn.Embedding default is N(0, 1)).
        self.weight = jax.random.normal(key, (num_speakers, dim), dtype=jnp.float32)

    def speaker_name2id(self, name):
        return self.speakers[name]

    def __call__(self, x):
        return speaker_table_forward(x, self.weight)


if __name__ == "__main__":
    key = jax.random.PRNGKey(0)
    wkey, ikey = jax.random.split(key)

    num_speakers = 16
    dim = 32
    speakers = {f"spk_{i}": i for i in range(num_speakers)}

    module = SpeakerTablePallas(speakers, dim, wkey)

    # Batch of speaker ids, shape (2, 8) (arbitrary index shape, like torch).
    x = jax.random.randint(ikey, (2, 8), 0, num_speakers, dtype=jnp.int32)

    out = module(x)
    out = jax.block_until_ready(out)

    # Correctness check against plain JAX take (== torch embedding semantics).
    ref = jnp.take(module.weight, x.reshape(-1), axis=0).reshape(x.shape + (dim,))
    assert out.shape == (2, 8, dim), out.shape
    assert jnp.allclose(out, ref), "mismatch vs reference gather"

    print("KERNEL_OK")
</pallas_src>

<mosaic_0001>
module attributes {stable_mosaic.version = 11 : i64} {
  func.func @_gather_block_kernel(%arg0: i32, %arg1: memref<16x1xi32, #tpu.memory_space<vmem>>, %arg2: memref<16x128xf32, #tpu.memory_space<vmem>>, %arg3: memref<16x128xf32, #tpu.memory_space<vmem>>) attributes {dimension_semantics = [#tpu.dimension_semantics<parallel>], iteration_bounds = array<i64: 1>, scalar_prefetch = 0 : i64, scratch_operands = 0 : i64, tpu.core_type = #tpu.core_type<tc>, window_params = [{transform_indices = @transform_0, window_bounds = array<i64: 16, 1>}, {pipeline_mode = #tpu.pipeline_mode<synchronous>, transform_indices = @transform_1, window_bounds = array<i64: 16, 128>}, {transform_indices = @transform_2, window_bounds = array<i64: 16, 128>}]} {
    %c0 = arith.constant 0 : index
    %c0_0 = arith.constant 0 : index
    %0 = vector.load %arg1[%c0, %c0_0] : memref<16x1xi32, #tpu.memory_space<vmem>>, vector<16x1xi32>
    %1 = tpu.iota {dimensions = array<i32: 1>} : vector<16x16xi32>
    %2 = vector.broadcast %0 : vector<16x1xi32> to vector<16x16xi32>
    %3 = arith.cmpi eq, %1, %2 : vector<16x16xi32>
    %4 = arith.extui %3 : vector<16x16xi1> to vector<16x16xi32>
    %5 = arith.sitofp %4 : vector<16x16xi32> to vector<16x16xf32>
    %c0_1 = arith.constant 0 : index
    %c0_2 = arith.constant 0 : index
    %6 = vector.load %arg2[%c0_1, %c0_2] : memref<16x128xf32, #tpu.memory_space<vmem>>, vector<16x128xf32>
    %cst = arith.constant dense<0.000000e+00> : vector<16x128xf32>
    %7 = tpu.matmul %5, %6, %cst {dimension_numbers = #tpu.dot_dimension_numbers<[1], [0], [0], [1], [0, 0, 1, 1], [], []>} : vector<16x16xf32>, vector<16x128xf32>, vector<16x128xf32> -> vector<16x128xf32>
    %c0_3 = arith.constant 0 : index
    %c0_4 = arith.constant 0 : index
    %8 = vector.load %arg3[%c0_3, %c0_4] : memref<16x128xf32, #tpu.memory_space<vmem>>, vector<16x128xf32>
    tpu.vector_store %arg3[%c0_3, %c0_4], %7 {strides = array<i32>} : memref<16x128xf32, #tpu.memory_space<vmem>>, vector<16x128xf32>,
    return
  }
  func.func @transform_0(%arg0: i32) -> (i32, i32) {
    %c0_i32 = arith.constant 0 : i32
    %c0_i32_0 = arith.constant 0 : i32
    return %arg0, %c0_i32 : i32, i32
  }
  func.func @transform_1(%arg0: i32) -> (i32, i32) {
    %c0_i32 = arith.constant 0 : i32
    %c0_i32_0 = arith.constant 0 : i32
    %c0_i32_1 = arith.constant 0 : i32
    return %c0_i32, %c0_i32_0 : i32, i32
  }
  func.func @transform_2(%arg0: i32) -> (i32, i32) {
    %c0_i32 = arith.constant 0 : i32
    %c0_i32_0 = arith.constant 0 : i32
    return %arg0, %c0_i32 : i32, i32
  }
}

</mosaic_0001>

<llo_original>
// kernel: tpu_custom_call.1
$region0: #{tpu_custom_call.1}
  #allocation0 [shape = 'u32[]', space=smem, size = 0x4, offset = 0x4, fixed_abs, tag = 'smem constant byte address 0x4 - core index']
  #allocation1 [shape = 'u32[144,128]{1,0:T(1,128)}', space=vmem, size = 0x12000, scoped, tag = 'internal scratch']
  %s0 = inlined_call_operand.vmem [shape: s32[16,1], index: 0, kind: input, shape index: {}]
  %s1 = inlined_call_operand.vmem [shape: f32[16,128], index: 1, kind: input, shape index: {}]
  %s2 = inlined_call_operand.hbm [shape: f32[16,128], index: 2, kind: output, shape index: {}]
  %s3 = sld [smem:[#allocation0]]
  $region18: #{tpu_custom_call.1} parent=0
    _
  %s5 = ssub.s32 1, %s3
  %s6 = scalar_select 0, %s5, %s3
  $region1: #{tpu_custom_call.1} parent=0
    #allocation2 [shape = 'u8[8192]{0}', space=vmem, size = 0x2000, scoped, tag = 'output window, operand 0, single buffered']
    #allocation3 [shape = 's32[1]{0}', space=sflag, size = 0x4, scoped, tag = 'scoped memory for tpu_custom_call.1']
    %7 = vsyncpa [#allocation3], 0
    // Predicated region
    $region2: #{tpu_custom_call.1} parent=1 // pred_check
      _
    $region3: #{tpu_custom_call.1} parent=1 // pred_check_branch
      %9 = sbr.rel (0) target = $region5
    $region4: #{tpu_custom_call.1} parent=1 // pred_region
      _
    $region5: #{tpu_custom_call.1} parent=1 // pred_fallthru
      _
    // Predicated region
    $region6: #{tpu_custom_call.1} parent=1 // pred_check
      _
    $region7: #{tpu_custom_call.1} parent=1 // pred_check_branch
      %11 = sbr.rel (0) target = $region9
    $region8: #{tpu_custom_call.1} parent=1 // pred_region
      _
    $region9: #{tpu_custom_call.1} parent=1 // pred_fallthru
      _
    %v12 = vld [vmem:[%s0] sm:$0xff]
    %v13 = vld [vmem:[%s0 + $0x8] sm:$0xff]
    %v14 = vlaneseq
    %v15 = vand.u32 %v14, 127
    %16 = vset.pattern.permute.xlu0 0
    %17 = vperm.xlu0 %16, %v12
    %v18 = vpop.permute.xlu0 %17
    %19 = vset.pattern.permute.xlu0 0
    %20 = vperm.xlu0 %19, %v13
    %v21 = vpop.permute.xlu0 %20
    %vm22 = vcmp.eq.s32.totalorder %v15, %v18
    %vm23 = vcmp.eq.s32.totalorder %v15, %v21
    %v24 = vsel %vm22, 1, 0
    %v25 = vsel %vm23, 1, 0
    %v26 = vcvt.s32.f32 %v24
    %v27 = vcvt.s32.f32 %v25
    %v28 = vld [vmem:[%s1] sm:$0xff]
    %v29 = vld [vmem:[%s1 + $0x8] sm:$0xff]
    %vm30 = vcmask 130048
    %v32 = vsel %vm30, %v26, 0
    %v35 = vsel %vm30, %v27, 0
    %37 = vmatprep.subr.mxu0 0.0
    %38 = vmatpush1.msra.mxu0 %v28
    %39 = vmatprep.subr.mxu0 0.0
    %40 = vmatpush1.msra.mxu0 %v29
    %41 = vmatprep.subr.mxu0 0.0
    %42 = vmatpush1.msra.mxu0 0.0
    %43 = vmatprep.subr.mxu0 0.0
    %44 = vmatpush1.msra.mxu0 0.0
    %45 = vmatprep.subr.mxu0 0.0
    %46 = vmatpush1.msra.mxu0 0.0
    %47 = vmatprep.subr.mxu0 0.0
    %48 = vmatpush1.msra.mxu0 0.0
    %49 = vmatprep.subr.mxu0 0.0
    %50 = vmatpush1.msra.mxu0 0.0
    %51 = vmatprep.subr.mxu0 0.0
    %52 = vmatpush1.msra.mxu0 0.0
    %53 = vmatprep.subr.mxu0 0.0
    %54 = vmatpush1.msra.mxu0 0.0
    %55 = vmatprep.subr.mxu0 0.0
    %56 = vmatpush1.msra.mxu0 0.0
    %57 = vmatprep.subr.mxu0 0.0
    %58 = vmatpush1.msra.mxu0 0.0
    %59 = vmatprep.subr.mxu0 0.0
    %60 = vmatpush1.msra.mxu0 0.0
    %61 = vmatprep.subr.mxu0 0.0
    %62 = vmatpush1.msra.mxu0 0.0
    %63 = vmatprep.subr.mxu0 0.0
    %64 = vmatpush1.msra.mxu0 0.0
    %65 = vmatprep.subr.mxu0 0.0
    %66 = vmatpush1.msra.mxu0 0.0
    %67 = vmatprep.subr.mxu0 0.0
    %68 = vmatpush1.msra.mxu0 0.0
    %69 = vmatprep.subr.mxu0 0.0
    %70 = vmatpush1.msra.mxu0 0.0
    %71 = vmatprep.subr.mxu0 0.0
    %72 = vmatpush1.msra.mxu0 0.0
    %73 = vmatprep.subr.mxu0 0.0
    %74 = vmatpush1.msra.mxu0 0.0
    %75 = vmatprep.subr.mxu0 0.0
    %76 = vmatpush1.msra.mxu0 0.0
    %77 = vmatprep.subr.mxu0 0.0
    %78 = vmatpush1.msra.mxu0 0.0
    %79 = vmatprep.subr.mxu0 0.0
    %80 = vmatpush1.msra.mxu0 0.0
    %81 = vmatprep.subr.mxu0 0.0
    %82 = vmatpush1.msra.mxu0 0.0
    %83 = vmatprep.subr.mxu0 0.0
    %84 = vmatpush1.msra.mxu0 0.0
    %85 = vmatprep.subr.mxu0 0.0
    %86 = vmatpush1.msra.mxu0 0.0
    %87 = vmatprep.subr.mxu0 0.0
    %88 = vmatpush1.msra.mxu0 0.0
    %89 = vmatprep.subr.mxu0 0.0
    %90 = vmatpush1.msra.mxu0 0.0
    %91 = vmatprep.subr.mxu0 0.0
    %92 = vmatpush1.msra.mxu0 0.0
    %93 = vmatprep.subr.mxu0 0.0
    %94 = vmatpush1.msra.mxu0 0.0
    %95 = vmatprep.subr.mxu0 0.0
    %96 = vmatpush1.msra.mxu0 0.0
    %97 = vmatprep.subr.mxu0 0.0
    %98 = vmatpush1.msra.mxu0 0.0
    %99 = vmatprep.subr.mxu0 0.0
    %100 = vmatpush1.msra.mxu0 0.0
    %101 = vmatprep.mubr.f32.mxu0 0.0
    %102 = vmatmul.mubr.f32.gmra.mrb[0].mxu0 %v32
    %v103 = vpop.f32.mrb[0].mxu0
    %v104 = vadd.f32 0.0, %v103
    %v105 = vpop.f32.mrb[0].mxu0
    %106 = vmatprep.mubr.f32.mxu0 0.0
    %107 = vmatmul.mubr.f32.gmra.mrb[0].mxu0 %v35
    %v108 = vpop.f32.mrb[0].mxu0
    %v109 = vadd.f32 0.0, %v108
    %v110 = vpop.f32.mrb[0].mxu0
    %111 = vdwg.mxu0
    %112 = vst [vmem:[#allocation2] sm:$0xff] %v104
    %113 = vst [vmem:[#allocation2 + $0x8] sm:$0xff] %v109
    // Predicated region
    $region10: #{tpu_custom_call.1} parent=1 // pred_check
      _
    $region11: #{tpu_custom_call.1} parent=1 // pred_check_branch
      %115 = sbr.rel (0) target = $region13
    $region12: #{tpu_custom_call.1} parent=1 // pred_region
      %s117 = ssub.s32 256, 256
      %118 = vsyncadd [#allocation3], %s117
      %s119 = sshll.u32 [#allocation2], 4
      %s120 = int_to_ptr.vmem [resolvable:$true] %s119
      %125 = dma.vmem_to_hbm [thread:$0]  %s120, 256, %s2, [#allocation3], 128, 128, 8
    $region13: #{tpu_custom_call.1} parent=1 // pred_fallthru
      _
    // Predicated region
    $region14: #{tpu_custom_call.1} parent=1 // pred_check
      _
    $region15: #{tpu_custom_call.1} parent=1 // pred_check_branch
      %127 = sbr.rel (0) target = $region17
    $region16: #{tpu_custom_call.1} parent=1 // pred_region
      %128 = dma.done [#allocation3], 256
    $region17: #{tpu_custom_call.1} parent=1 // pred_fallthru
      _
    %129 = vsyncpa [#allocation3], 1

</llo_original>
